<compile_context>
chip_gen: v7x
topology: tpu7x:2x2x1
jax: 0.10.0
libtpu: 0.0.40
codegen_flags: <defaults>
</compile_context>

<pallas_src>
import functools

import jax
import jax.numpy as jnp
from jax.experimental import pallas as pl
from jax.experimental.pallas import tpu as pltpu

_LANE = 128          # lane width; 128-multiples keep matmuls / stores lane-dense
_SUBLANE_BF16 = 16   # bf16 packs 16 sublanes per vreg -> batch tiles are x16


def _round_up(n, m):
    return (n + m - 1) // m * m


def _leaky_relu(x, slope=0.1):
    return jnp.where(x >= 0, x, slope * x)


def mlp_kernel(x_ref, w1_ref, b1_ref, w2_ref, b2_ref, w3_ref, b3_ref, o_ref):
    # x and weights are bf16; MXU accumulates in f32, LeakyReLU stays f32 on VPU.
    x = x_ref[...]

    h1 = jnp.dot(x, w1_ref[...], preferred_element_type=jnp.float32) + b1_ref[...]
    h1 = _leaky_relu(h1).astype(jnp.bfloat16)

    h2 = jnp.dot(h1, w2_ref[...], preferred_element_type=jnp.float32) + b2_ref[...]
    h2 = _leaky_relu(h2).astype(jnp.bfloat16)

    out = jnp.dot(h2, w3_ref[...], preferred_element_type=jnp.float32) + b3_ref[...]
    o_ref[...] = out.astype(o_ref.dtype)   # bf16 writeback (halves output HBM bytes)


def _vmem_budget_bytes():
    """Per-generation VMEM tiling budget: half of physical VMEM, safe fallback."""
    try:
        return int(pltpu.get_tpu_info().vmem_capacity_bytes) // 2
    except Exception:
        return 32 * 1024 * 1024   # safe on v5e/v6e (128 MiB) and v7x (64 MiB/TC)


@functools.partial(jax.jit, static_argnums=(2, 3, 4, 5))
def _forward_impl(x, params, nout, block_b, single_buffer_weights, vmem_budget):
    B, ninp = x.shape
    Din, D1 = params["w1"].shape
    D2 = params["w2"].shape[1]
    Dout = params["w3"].shape[1]

    # ---- batch-tile selection (HBM-roofline driven, VMEM-budget capped) ----
    weight_bytes = sum(int(v.size) * v.dtype.itemsize for v in params.values())
    if not single_buffer_weights:
        weight_bytes *= 2                      # default pipelining double-buffers
    # resident bytes per batch row: double-buffered bf16 x/out tiles + f32 activations
    per_row = 2 * 2 * Din + 2 * 2 * Dout + 4 * (D1 + D2 + Dout)
    tb_cap = max(_SUBLANE_BF16, (vmem_budget - weight_bytes) // per_row)
    tb = min(block_b, tb_cap)
    tb = max(_SUBLANE_BF16, (tb // _SUBLANE_BF16) * _SUBLANE_BF16)

    b_rounded = _round_up(B, _SUBLANE_BF16)
    if b_rounded >= 1024:
        # keep >=2 grid steps so v7x can shard the batch across both TensorCores,
        # while keeping tiles >=512 rows (~85% of HBM roofline).
        tb = min(tb, max(512, _round_up(pl.cdiv(b_rounded, 2), _SUBLANE_BF16)))
    tb = min(tb, b_rounded)
    b_pad = _round_up(B, tb)
    grid = (b_pad // tb,)

    # ---- input: cast to bf16; pad only when actually needed ----
    if ninp == Din and B == b_pad:
        x_p = x.astype(jnp.bfloat16)
    else:
        x_p = jnp.zeros((b_pad, Din), jnp.bfloat16).at[:B, :ninp].set(
            x.astype(jnp.bfloat16))

    tile_spec = lambda shape: pl.BlockSpec(shape, lambda i: (i, 0))
    if single_buffer_weights:
        const_spec = lambda shape: pl.BlockSpec(
            shape, lambda i: (0, 0), pipeline_mode=pl.Buffered(1))
    else:
        const_spec = lambda shape: pl.BlockSpec(shape, lambda i: (0, 0))

    # explicit scoped-VMEM limit: weights + double-buffered tiles + activations + headroom
    needed = (weight_bytes
              + 2 * tb * (Din + Dout) * 2        # double-buffered bf16 x/out tiles
              + tb * (D1 + D2 + Dout) * 4)       # f32 intermediates
    vmem_limit = int(min(max(needed * 3 // 2 + (4 << 20), 16 << 20), 56 << 20))

    flops = 2 * b_pad * (Din * D1 + D1 * D2 + D2 * Dout)
    bytes_accessed = (
        b_pad * Din * 2                              # bf16 x
        + (Din * D1 + D1 * D2 + D2 * Dout) * 2       # bf16 weights
        + (D1 + D2 + Dout) * 4                       # f32 biases
        + b_pad * Dout * 2                           # bf16 output
    )

    out = pl.pallas_call(
        mlp_kernel,
        out_shape=jax.ShapeDtypeStruct((b_pad, Dout), jnp.bfloat16),
        grid=grid,
        in_specs=[
            tile_spec((tb, Din)),
            const_spec((Din, D1)), const_spec((1, D1)),
            const_spec((D1, D2)), const_spec((1, D2)),
            const_spec((D2, Dout)), const_spec((1, Dout)),
        ],
        out_specs=tile_spec((tb, Dout)),
        compiler_params=pltpu.CompilerParams(
            dimension_semantics=("parallel",),
            vmem_limit_bytes=vmem_limit),
        cost_estimate=pl.CostEstimate(
            flops=flops, transcendentals=0, bytes_accessed=bytes_accessed),
    )(x_p, params["w1"], params["b1"], params["w2"], params["b2"],
      params["w3"], params["b3"])

    # slice + f32 cast fuse with the kernel epilogue inside this jit
    return out[:B, :nout].astype(jnp.float32)


_SINGLE_BUFFER_OK = None   # cached: does this Pallas build accept pl.Buffered(1)?


def neural_net_forward(x, params, nout, *, block_b=1024):
    """x: (B, ninp) f32.  params: 128-padded bf16 weights (in,out) + f32 biases (1,out).
    Returns (B, nout) f32."""
    global _SINGLE_BUFFER_OK
    budget = _vmem_budget_bytes()
    if _SINGLE_BUFFER_OK is None:
        try:
            out = _forward_impl(x, params, nout, block_b, True, budget)
            jax.block_until_ready(out)
            _SINGLE_BUFFER_OK = True
            return out
        except Exception:
            # installed Pallas rejects single-buffered specs -> default buffering
            _SINGLE_BUFFER_OK = False
    return _forward_impl(x, params, nout, block_b, _SINGLE_BUFFER_OK, budget)


def init_params(key, ninp, nhid1, nhid2, nout):
    """nn.Linear-style uniform(-1/sqrt(fan_in), 1/sqrt(fan_in)) init.

    Returns (params, ref_params):
      params     : lane-padded-to-128 kernel params, bf16 weights / f32 biases.
      ref_params : unpadded f32 weights/biases for a pure-JAX reference.
    """
    ks = jax.random.split(key, 6)

    def linear(kw, kb, fan_in, fan_out):
        bound = 1.0 / jnp.sqrt(fan_in)
        w = jax.random.uniform(kw, (fan_in, fan_out), jnp.float32, -bound, bound)
        b = jax.random.uniform(kb, (1, fan_out), jnp.float32, -bound, bound)
        return w, b

    w1, b1 = linear(ks[0], ks[1], ninp, nhid1)
    w2, b2 = linear(ks[2], ks[3], nhid1, nhid2)
    w3, b3 = linear(ks[4], ks[5], nhid2, nout)
    ref_params = dict(w1=w1, b1=b1, w2=w2, b2=b2, w3=w3, b3=b3)

    def pad_w(w):
        fi, fo = w.shape
        wp = jnp.zeros((_round_up(fi, _LANE), _round_up(fo, _LANE)), jnp.float32)
        return wp.at[:fi, :fo].set(w).astype(jnp.bfloat16)

    def pad_b(b):
        fo = b.shape[1]
        bp = jnp.zeros((1, _round_up(fo, _LANE)), jnp.float32)
        return bp.at[:, :fo].set(b)

    params = dict(w1=pad_w(w1), b1=pad_b(b1),
                  w2=pad_w(w2), b2=pad_b(b2),
                  w3=pad_w(w3), b3=pad_b(b3))
    return params, ref_params


def _reference_bf16(x, p, ninp, nout):
    """Mirrors the kernel's numerics (bf16 operands/output, f32 accumulation)."""
    xp = jnp.zeros((x.shape[0], p["w1"].shape[0]), jnp.bfloat16)
    xp = xp.at[:, :ninp].set(x.astype(jnp.bfloat16))
    h1 = jnp.dot(xp, p["w1"], preferred_element_type=jnp.float32) + p["b1"]
    h1 = jnp.where(h1 >= 0, h1, 0.1 * h1).astype(jnp.bfloat16)
    h2 = jnp.dot(h1, p["w2"], preferred_element_type=jnp.float32) + p["b2"]
    h2 = jnp.where(h2 >= 0, h2, 0.1 * h2).astype(jnp.bfloat16)
    out = jnp.dot(h2, p["w3"], preferred_element_type=jnp.float32) + p["b3"]
    return out.astype(jnp.bfloat16).astype(jnp.float32)[:, :nout]


def _reference_f32(x, p):
    """Pure f32 semantic reference (matches the PyTorch module)."""
    h1 = x @ p["w1"] + p["b1"]
    h1 = jnp.where(h1 >= 0, h1, 0.1 * h1)
    h2 = h1 @ p["w2"] + p["b2"]
    h2 = jnp.where(h2 >= 0, h2, 0.1 * h2)
    return h2 @ p["w3"] + p["b3"]


if __name__ == "__main__":
    ninp, nhid1, nhid2, nout = 32, 64, 48, 16
    batch = 8

    key = jax.random.PRNGKey(0)
    kx, kp = jax.random.split(key)
    x = jax.random.normal(kx, (batch, ninp), jnp.float32)
    params, ref_params = init_params(kp, ninp, nhid1, nhid2, nout)

    out = neural_net_forward(x, params, nout)
    out = jax.block_until_ready(out)
    assert out.shape == (batch, nout)
    assert out.dtype == jnp.float32

    # Tight check against a reference that mimics the kernel's bf16/f32 numerics.
    ref_b = _reference_bf16(x, params, ninp, nout)
    assert jnp.allclose(out, ref_b, atol=2e-2, rtol=2e-2)

    # Looser semantic check against the full-precision PyTorch-equivalent forward.
    # NOTE: the kernel runs in bf16 (x, activations, output) with f32 MXU
    # accumulation, so results are not bitwise-identical to an f32 forward.
    ref_f = _reference_f32(x, ref_params)
    assert jnp.allclose(out, ref_f, atol=5e-2, rtol=5e-2)

    print("KERNEL_OK")
</pallas_src>

<mosaic_0001>
module attributes {stable_mosaic.version = 11 : i64} {
  func.func @mlp_kernel(%arg0: i32, %arg1: memref<16x128xbf16, #tpu.memory_space<vmem>>, %arg2: memref<128x128xbf16, #tpu.memory_space<vmem>>, %arg3: memref<1x128xf32, #tpu.memory_space<vmem>>, %arg4: memref<128x128xbf16, #tpu.memory_space<vmem>>, %arg5: memref<1x128xf32, #tpu.memory_space<vmem>>, %arg6: memref<128x128xbf16, #tpu.memory_space<vmem>>, %arg7: memref<1x128xf32, #tpu.memory_space<vmem>>, %arg8: memref<16x128xbf16, #tpu.memory_space<vmem>>) attributes {dimension_semantics = [#tpu.dimension_semantics<parallel>], iteration_bounds = array<i64: 1>, scalar_prefetch = 0 : i64, scratch_operands = 0 : i64, tpu.core_type = #tpu.core_type<tc>, window_params = [{transform_indices = @transform_0, window_bounds = array<i64: 16, 128>}, {pipeline_mode = #tpu.pipeline_mode<synchronous>, transform_indices = @transform_1, window_bounds = array<i64: 128, 128>}, {pipeline_mode = #tpu.pipeline_mode<synchronous>, transform_indices = @transform_2, window_bounds = array<i64: 1, 128>}, {pipeline_mode = #tpu.pipeline_mode<synchronous>, transform_indices = @transform_3, window_bounds = array<i64: 128, 128>}, {pipeline_mode = #tpu.pipeline_mode<synchronous>, transform_indices = @transform_4, window_bounds = array<i64: 1, 128>}, {pipeline_mode = #tpu.pipeline_mode<synchronous>, transform_indices = @transform_5, window_bounds = array<i64: 128, 128>}, {pipeline_mode = #tpu.pipeline_mode<synchronous>, transform_indices = @transform_6, window_bounds = array<i64: 1, 128>}, {transform_indices = @transform_7, window_bounds = array<i64: 16, 128>}]} {
    %c0 = arith.constant 0 : index
    %c0_0 = arith.constant 0 : index
    %0 = vector.load %arg1[%c0, %c0_0] : memref<16x128xbf16, #tpu.memory_space<vmem>>, vector<16x128xbf16>
    %c0_1 = arith.constant 0 : index
    %c0_2 = arith.constant 0 : index
    %1 = vector.load %arg2[%c0_1, %c0_2] : memref<128x128xbf16, #tpu.memory_space<vmem>>, vector<128x128xbf16>
    %cst = arith.constant dense<0.000000e+00> : vector<16x128xf32>
    %2 = tpu.matmul %0, %1, %cst {dimension_numbers = #tpu.dot_dimension_numbers<[1], [0], [0], [1], [0, 0, 1, 1], [], []>} : vector<16x128xbf16>, vector<128x128xbf16>, vector<16x128xf32> -> vector<16x128xf32>
    %c0_3 = arith.constant 0 : index
    %c0_4 = arith.constant 0 : index
    %3 = vector.load %arg3[%c0_3, %c0_4] : memref<1x128xf32, #tpu.memory_space<vmem>>, vector<1x128xf32>
    %4 = vector.broadcast %3 : vector<1x128xf32> to vector<16x128xf32>
    %5 = arith.addf %2, %4 : vector<16x128xf32>
    %cst_5 = arith.constant 0.000000e+00 : f32
    %6 = vector.broadcast %cst_5 : f32 to vector<16x128xf32>
    %7 = arith.cmpf oge, %5, %6 : vector<16x128xf32>
    %cst_6 = arith.constant 1.000000e-01 : f32
    %8 = vector.broadcast %cst_6 : f32 to vector<16x128xf32>
    %9 = arith.mulf %8, %5 : vector<16x128xf32>
    %10 = arith.select %7, %5, %9 : vector<16x128xi1>, vector<16x128xf32>
    %11 = arith.truncf %10 : vector<16x128xf32> to vector<16x128xbf16>
    %c0_7 = arith.constant 0 : index
    %c0_8 = arith.constant 0 : index
    %12 = vector.load %arg4[%c0_7, %c0_8] : memref<128x128xbf16, #tpu.memory_space<vmem>>, vector<128x128xbf16>
    %cst_9 = arith.constant dense<0.000000e+00> : vector<16x128xf32>
    %13 = tpu.matmul %11, %12, %cst_9 {dimension_numbers = #tpu.dot_dimension_numbers<[1], [0], [0], [1], [0, 0, 1, 1], [], []>} : vector<16x128xbf16>, vector<128x128xbf16>, vector<16x128xf32> -> vector<16x128xf32>
    %c0_10 = arith.constant 0 : index
    %c0_11 = arith.constant 0 : index
    %14 = vector.load %arg5[%c0_10, %c0_11] : memref<1x128xf32, #tpu.memory_space<vmem>>, vector<1x128xf32>
    %15 = vector.broadcast %14 : vector<1x128xf32> to vector<16x128xf32>
    %16 = arith.addf %13, %15 : vector<16x128xf32>
    %cst_12 = arith.constant 0.000000e+00 : f32
    %17 = vector.broadcast %cst_12 : f32 to vector<16x128xf32>
    %18 = arith.cmpf oge, %16, %17 : vector<16x128xf32>
    %cst_13 = arith.constant 1.000000e-01 : f32
    %19 = vector.broadcast %cst_13 : f32 to vector<16x128xf32>
    %20 = arith.mulf %19, %16 : vector<16x128xf32>
    %21 = arith.select %18, %16, %20 : vector<16x128xi1>, vector<16x128xf32>
    %22 = arith.truncf %21 : vector<16x128xf32> to vector<16x128xbf16>
    %c0_14 = arith.constant 0 : index
    %c0_15 = arith.constant 0 : index
    %23 = vector.load %arg6[%c0_14, %c0_15] : memref<128x128xbf16, #tpu.memory_space<vmem>>, vector<128x128xbf16>
    %cst_16 = arith.constant dense<0.000000e+00> : vector<16x128xf32>
    %24 = tpu.matmul %22, %23, %cst_16 {dimension_numbers = #tpu.dot_dimension_numbers<[1], [0], [0], [1], [0, 0, 1, 1], [], []>} : vector<16x128xbf16>, vector<128x128xbf16>, vector<16x128xf32> -> vector<16x128xf32>
    %c0_17 = arith.constant 0 : index
    %c0_18 = arith.constant 0 : index
    %25 = vector.load %arg7[%c0_17, %c0_18] : memref<1x128xf32, #tpu.memory_space<vmem>>, vector<1x128xf32>
    %26 = vector.broadcast %25 : vector<1x128xf32> to vector<16x128xf32>
    %27 = arith.addf %24, %26 : vector<16x128xf32>
    %28 = arith.truncf %27 : vector<16x128xf32> to vector<16x128xbf16>
    %c0_19 = arith.constant 0 : index
    %c0_20 = arith.constant 0 : index
    %29 = vector.load %arg8[%c0_19, %c0_20] : memref<16x128xbf16, #tpu.memory_space<vmem>>, vector<16x128xbf16>
    tpu.vector_store %arg8[%c0_19, %c0_20], %28 {strides = array<i32>} : memref<16x128xbf16, #tpu.memory_space<vmem>>, vector<16x128xbf16>,
    return
  }
  func.func @transform_0(%arg0: i32) -> (i32, i32) {
    %c0_i32 = arith.constant 0 : i32
    %c0_i32_0 = arith.constant 0 : i32
    return %arg0, %c0_i32 : i32, i32
  }
  func.func @transform_1(%arg0: i32) -> (i32, i32) {
    %c0_i32 = arith.constant 0 : i32
    %c0_i32_0 = arith.constant 0 : i32
    %c0_i32_1 = arith.constant 0 : i32
    return %c0_i32, %c0_i32_0 : i32, i32
  }
  func.func @transform_2(%arg0: i32) -> (i32, i32) {
    %c0_i32 = arith.constant 0 : i32
    %c0_i32_0 = arith.constant 0 : i32
    %c0_i32_1 = arith.constant 0 : i32
    return %c0_i32, %c0_i32_0 : i32, i32
  }
  func.func @transform_3(%arg0: i32) -> (i32, i32) {
    %c0_i32 = arith.constant 0 : i32
    %c0_i32_0 = arith.constant 0 : i32
    %c0_i32_1 = arith.constant 0 : i32
    return %c0_i32, %c0_i32_0 : i32, i32
  }
  func.func @transform_4(%arg0: i32) -> (i32, i32) {
    %c0_i32 = arith.constant 0 : i32
    %c0_i32_0 = arith.constant 0 : i32
    %c0_i32_1 = arith.constant 0 : i32
    return %c0_i32, %c0_i32_0 : i32, i32
  }
  func.func @transform_5(%arg0: i32) -> (i32, i32) {
    %c0_i32 = arith.constant 0 : i32
    %c0_i32_0 = arith.constant 0 : i32
    %c0_i32_1 = arith.constant 0 : i32
    return %c0_i32, %c0_i32_0 : i32, i32
  }
  func.func @transform_6(%arg0: i32) -> (i32, i32) {
    %c0_i32 = arith.constant 0 : i32
    %c0_i32_0 = arith.constant 0 : i32
    %c0_i32_1 = arith.constant 0 : i32
    return %c0_i32, %c0_i32_0 : i32, i32
  }
  func.func @transform_7(%arg0: i32) -> (i32, i32) {
    %c0_i32 = arith.constant 0 : i32
    %c0_i32_0 = arith.constant 0 : i32
    return %arg0, %c0_i32 : i32, i32
  }
}

module attributes {stable_mosaic.version = 11 : i64} {
  func.func @mlp_kernel(%arg0: i32, %arg1: memref<16x128xbf16, #tpu.memory_space<vmem>>, %arg2: memref<128x128xbf16, #tpu.memory_space<vmem>>, %arg3: memref<1x128xf32, #tpu.memory_space<vmem>>, %arg4: memref<128x128xbf16, #tpu.memory_space<vmem>>, %arg5: memref<1x128xf32, #tpu.memory_space<vmem>>, %arg6: memref<128x128xbf16, #tpu.memory_space<vmem>>, %arg7: memref<1x128xf32, #tpu.memory_space<vmem>>, %arg8: memref<16x128xbf16, #tpu.memory_space<vmem>>) attributes {dimension_semantics = [#tpu.dimension_semantics<parallel>], iteration_bounds = array<i64: 1>, scalar_prefetch = 0 : i64, scratch_operands = 0 : i64, tpu.core_type = #tpu.core_type<tc>, window_params = [{transform_indices = @transform_0, window_bounds = array<i64: 16, 128>}, {pipeline_mode = #tpu.pipeline_mode<synchronous>, transform_indices = @transform_1, window_bounds = array<i64: 128, 128>}, {pipeline_mode = #tpu.pipeline_mode<synchronous>, transform_indices = @transform_2, window_bounds = array<i64: 1, 128>}, {pipeline_mode = #tpu.pipeline_mode<synchronous>, transform_indices = @transform_3, window_bounds = array<i64: 128, 128>}, {pipeline_mode = #tpu.pipeline_mode<synchronous>, transform_indices = @transform_4, window_bounds = array<i64: 1, 128>}, {pipeline_mode = #tpu.pipeline_mode<synchronous>, transform_indices = @transform_5, window_bounds = array<i64: 128, 128>}, {pipeline_mode = #tpu.pipeline_mode<synchronous>, transform_indices = @transform_6, window_bounds = array<i64: 1, 128>}, {transform_indices = @transform_7, window_bounds = array<i64: 16, 128>}]} {
    %c0 = arith.constant 0 : index
    %c0_0 = arith.constant 0 : index
    %0 = vector.load %arg1[%c0, %c0_0] : memref<16x128xbf16, #tpu.memory_space<vmem>>, vector<16x128xbf16>
    %c0_1 = arith.constant 0 : index
    %c0_2 = arith.constant 0 : index
    %1 = vector.load %arg2[%c0_1, %c0_2] : memref<128x128xbf16, #tpu.memory_space<vmem>>, vector<128x128xbf16>
    %cst = arith.constant dense<0.000000e+00> : vector<16x128xf32>
    %2 = tpu.matmul %0, %1, %cst {dimension_numbers = #tpu.dot_dimension_numbers<[1], [0], [0], [1], [0, 0, 1, 1], [], []>} : vector<16x128xbf16>, vector<128x128xbf16>, vector<16x128xf32> -> vector<16x128xf32>
    %c0_3 = arith.constant 0 : index
    %c0_4 = arith.constant 0 : index
    %3 = vector.load %arg3[%c0_3, %c0_4] : memref<1x128xf32, #tpu.memory_space<vmem>>, vector<1x128xf32>
    %4 = vector.broadcast %3 : vector<1x128xf32> to vector<16x128xf32>
    %5 = arith.addf %2, %4 : vector<16x128xf32>
    %cst_5 = arith.constant 0.000000e+00 : f32
    %6 = vector.broadcast %cst_5 : f32 to vector<16x128xf32>
    %7 = arith.cmpf oge, %5, %6 : vector<16x128xf32>
    %cst_6 = arith.constant 1.000000e-01 : f32
    %8 = vector.broadcast %cst_6 : f32 to vector<16x128xf32>
    %9 = arith.mulf %8, %5 : vector<16x128xf32>
    %10 = arith.select %7, %5, %9 : vector<16x128xi1>, vector<16x128xf32>
    %11 = arith.truncf %10 : vector<16x128xf32> to vector<16x128xbf16>
    %c0_7 = arith.constant 0 : index
    %c0_8 = arith.constant 0 : index
    %12 = vector.load %arg4[%c0_7, %c0_8] : memref<128x128xbf16, #tpu.memory_space<vmem>>, vector<128x128xbf16>
    %cst_9 = arith.constant dense<0.000000e+00> : vector<16x128xf32>
    %13 = tpu.matmul %11, %12, %cst_9 {dimension_numbers = #tpu.dot_dimension_numbers<[1], [0], [0], [1], [0, 0, 1, 1], [], []>} : vector<16x128xbf16>, vector<128x128xbf16>, vector<16x128xf32> -> vector<16x128xf32>
    %c0_10 = arith.constant 0 : index
    %c0_11 = arith.constant 0 : index
    %14 = vector.load %arg5[%c0_10, %c0_11] : memref<1x128xf32, #tpu.memory_space<vmem>>, vector<1x128xf32>
    %15 = vector.broadcast %14 : vector<1x128xf32> to vector<16x128xf32>
    %16 = arith.addf %13, %15 : vector<16x128xf32>
    %cst_12 = arith.constant 0.000000e+00 : f32
    %17 = vector.broadcast %cst_12 : f32 to vector<16x128xf32>
    %18 = arith.cmpf oge, %16, %17 : vector<16x128xf32>
    %cst_13 = arith.constant 1.000000e-01 : f32
    %19 = vector.broadcast %cst_13 : f32 to vector<16x128xf32>
    %20 = arith.mulf %19, %16 : vector<16x128xf32>
    %21 = arith.select %18, %16, %20 : vector<16x128xi1>, vector<16x128xf32>
    %22 = arith.truncf %21 : vector<16x128xf32> to vector<16x128xbf16>
    %c0_14 = arith.constant 0 : index
    %c0_15 = arith.constant 0 : index
    %23 = vector.load %arg6[%c0_14, %c0_15] : memref<128x128xbf16, #tpu.memory_space<vmem>>, vector<128x128xbf16>
    %cst_16 = arith.constant dense<0.000000e+00> : vector<16x128xf32>
    %24 = tpu.matmul %22, %23, %cst_16 {dimension_numbers = #tpu.dot_dimension_numbers<[1], [0], [0], [1], [0, 0, 1, 1], [], []>} : vector<16x128xbf16>, vector<128x128xbf16>, vector<16x128xf32> -> vector<16x128xf32>
    %c0_17 = arith.constant 0 : index
    %c0_18 = arith.constant 0 : index
    %25 = vector.load %arg7[%c0_17, %c0_18] : memref<1x128xf32, #tpu.memory_space<vmem>>, vector<1x128xf32>
    %26 = vector.broadcast %25 : vector<1x128xf32> to vector<16x128xf32>
    %27 = arith.addf %24, %26 : vector<16x128xf32>
    %28 = arith.truncf %27 : vector<16x128xf32> to vector<16x128xbf16>
    %c0_19 = arith.constant 0 : index
    %c0_20 = arith.constant 0 : index
    %29 = vector.load %arg8[%c0_19, %c0_20] : memref<16x128xbf16, #tpu.memory_space<vmem>>, vector<16x128xbf16>
    tpu.vector_store %arg8[%c0_19, %c0_20], %28 {strides = array<i32>} : memref<16x128xbf16, #tpu.memory_space<vmem>>, vector<16x128xbf16>,
    return
  }
  func.func @transform_0(%arg0: i32) -> (i32, i32) {
    %c0_i32 = arith.constant 0 : i32
    %c0_i32_0 = arith.constant 0 : i32
    return %arg0, %c0_i32 : i32, i32
  }
  func.func @transform_1(%arg0: i32) -> (i32, i32) {
    %c0_i32 = arith.constant 0 : i32
    %c0_i32_0 = arith.constant 0 : i32
    %c0_i32_1 = arith.constant 0 : i32
    return %c0_i32, %c0_i32_0 : i32, i32
  }
  func.func @transform_2(%arg0: i32) -> (i32, i32) {
    %c0_i32 = arith.constant 0 : i32
    %c0_i32_0 = arith.constant 0 : i32
    %c0_i32_1 = arith.constant 0 : i32
    return %c0_i32, %c0_i32_0 : i32, i32
  }
  func.func @transform_3(%arg0: i32) -> (i32, i32) {
    %c0_i32 = arith.constant 0 : i32
    %c0_i32_0 = arith.constant 0 : i32
    %c0_i32_1 = arith.constant 0 : i32
    return %c0_i32, %c0_i32_0 : i32, i32
  }
  func.func @transform_4(%arg0: i32) -> (i32, i32) {
    %c0_i32 = arith.constant 0 : i32
    %c0_i32_0 = arith.constant 0 : i32
    %c0_i32_1 = arith.constant 0 : i32
    return %c0_i32, %c0_i32_0 : i32, i32
  }
  func.func @transform_5(%arg0: i32) -> (i32, i32) {
    %c0_i32 = arith.constant 0 : i32
    %c0_i32_0 = arith.constant 0 : i32
    %c0_i32_1 = arith.constant 0 : i32
    return %c0_i32, %c0_i32_0 : i32, i32
  }
  func.func @transform_6(%arg0: i32) -> (i32, i32) {
    %c0_i32 = arith.constant 0 : i32
    %c0_i32_0 = arith.constant 0 : i32
    %c0_i32_1 = arith.constant 0 : i32
    return %c0_i32, %c0_i32_0 : i32, i32
  }
  func.func @transform_7(%arg0: i32) -> (i32, i32) {
    %c0_i32 = arith.constant 0 : i32
    %c0_i32_0 = arith.constant 0 : i32
    return %arg0, %c0_i32 : i32, i32
  }
}

</mosaic_0001>

<llo_original>
// kernel: _forward_impl.1
$region0: #{_forward_impl.1}
  #allocation0 [shape = 'u32[]', space=smem, size = 0x4, offset = 0x4, fixed_abs, tag = 'smem constant byte address 0x4 - core index']
  #allocation1 [shape = 'u32[144,128]{1,0:T(1,128)}', space=vmem, size = 0x12000, scoped, tag = 'internal scratch']
  %s0 = inlined_call_operand.vmem [shape: bf16[16,128], index: 0, kind: input, shape index: {}]
  %s1 = inlined_call_operand.hbm [shape: bf16[128,128], index: 1, kind: input, shape index: {}]
  %s2 = inlined_call_operand.vmem [shape: f32[1,128], index: 2, kind: input, shape index: {}]
  %s3 = inlined_call_operand.hbm [shape: bf16[128,128], index: 3, kind: input, shape index: {}]
  %s4 = inlined_call_operand.vmem [shape: f32[1,128], index: 4, kind: input, shape index: {}]
  %s5 = inlined_call_operand.hbm [shape: bf16[128,128], index: 5, kind: input, shape index: {}]
  %s6 = inlined_call_operand.vmem [shape: f32[1,128], index: 6, kind: input, shape index: {}]
  %s7 = inlined_call_operand.vmem [shape: bf16[16,128], index: 7, kind: output, shape index: {}]
  %s8 = sld [smem:[#allocation0]]
  $region50: #{_forward_impl.1} parent=0
    _
  %s10 = ssub.s32 1, %s8
  %s11 = scalar_select 0, %s10, %s8
  $region1: #{_forward_impl.1} parent=0
    #allocation2 [shape = 'u8[32768]{0}', space=vmem, size = 0x8000, scoped, tag = 'input window, operand 1, single buffered']
    #allocation3 [shape = 's32[1]{0}', space=sflag, size = 0x4, scoped, tag = 'scoped memory for _forward_impl.1']
    #allocation4 [shape = 'u8[32768]{0}', space=vmem, size = 0x8000, scoped, tag = 'input window, operand 3, single buffered']
    #allocation5 [shape = 's32[1]{0}', space=sflag, size = 0x4, scoped, tag = 'scoped memory for _forward_impl.1']
    #allocation6 [shape = 'u8[32768]{0}', space=vmem, size = 0x8000, scoped, tag = 'input window, operand 5, single buffered']
    %12 = vsyncpa [#allocation3], 0
    %13 = vsyncpa [#allocation5], 0
    // Predicated region
    $region2: #{_forward_impl.1} parent=1 // pred_check
      _
    $region3: #{_forward_impl.1} parent=1 // pred_check_branch
      %15 = sbr.rel (0) target = $region5
    $region4: #{_forward_impl.1} parent=1 // pred_region
      _
    $region5: #{_forward_impl.1} parent=1 // pred_fallthru
      _
    // Predicated region
    $region6: #{_forward_impl.1} parent=1 // pred_check
      _
    $region7: #{_forward_impl.1} parent=1 // pred_check_branch
      %17 = sbr.rel (0) target = $region9
    $region8: #{_forward_impl.1} parent=1 // pred_region
      %s19 = ssub.s32 1024, 1024
      %20 = vsyncadd [#allocation3], %s19
      %s21 = sshll.u32 [#allocation2], 4
      %s22 = int_to_ptr.vmem [resolvable:$true] %s21
      %27 = dma.hbm_to_vmem [thread:$0]  %s1, 1024, %s22, [#allocation3], 64, 64, 4
    $region9: #{_forward_impl.1} parent=1 // pred_fallthru
      _
    // Predicated region
    $region10: #{_forward_impl.1} parent=1 // pred_check
      _
    $region11: #{_forward_impl.1} parent=1 // pred_check_branch
      %29 = sbr.rel (0) target = $region13
    $region12: #{_forward_impl.1} parent=1 // pred_region
      _
    $region13: #{_forward_impl.1} parent=1 // pred_fallthru
      _
    // Predicated region
    $region14: #{_forward_impl.1} parent=1 // pred_check
      _
    $region15: #{_forward_impl.1} parent=1 // pred_check_branch
      %31 = sbr.rel (0) target = $region17
    $region16: #{_forward_impl.1} parent=1 // pred_region
      %s33 = ssub.s32 1024, 1024
      %34 = vsyncadd [#allocation5], %s33
      %s35 = sshll.u32 [#allocation4], 4
      %s36 = int_to_ptr.vmem [resolvable:$true] %s35
      %41 = dma.hbm_to_vmem [thread:$0]  %s3, 1024, %s36, [#allocation5], 64, 64, 4
    $region17: #{_forward_impl.1} parent=1 // pred_fallthru
      _
    // Predicated region
    $region18: #{_forward_impl.1} parent=1 // pred_check
      _
    $region19: #{_forward_impl.1} parent=1 // pred_check_branch
      %43 = sbr.rel (0) target = $region21
    $region20: #{_forward_impl.1} parent=1 // pred_region
      _
    $region21: #{_forward_impl.1} parent=1 // pred_fallthru
      _
    // Predicated region
    $region22: #{_forward_impl.1} parent=1 // pred_check
      _
    $region23: #{_forward_impl.1} parent=1 // pred_check_branch
      %45 = sbr.rel (0) target = $region25
    $region24: #{_forward_impl.1} parent=1 // pred_region
      %s47 = ssub.s32 1024, 1024
      %48 = vsyncadd [#allocation5], %s47
      %s49 = sshll.u32 [#allocation6], 4
      %s50 = int_to_ptr.vmem [resolvable:$true] %s49
      %55 = dma.hbm_to_vmem [thread:$0]  %s5, 1024, %s50, [#allocation5], 64, 64, 4
    $region25: #{_forward_impl.1} parent=1 // pred_fallthru
      _
    // Predicated region
    $region26: #{_forward_impl.1} parent=1 // pred_check
      _
    $region27: #{_forward_impl.1} parent=1 // pred_check_branch
      %57 = sbr.rel (0) target = $region29
    $region28: #{_forward_impl.1} parent=1 // pred_region
      _
    $region29: #{_forward_impl.1} parent=1 // pred_fallthru
      _
    // Predicated region
    $region30: #{_forward_impl.1} parent=1 // pred_check
      _
    $region31: #{_forward_impl.1} parent=1 // pred_check_branch
      %59 = sbr.rel (0) target = $region33
    $region32: #{_forward_impl.1} parent=1 // pred_region
      %60 = dma.done [#allocation3], 1024
    $region33: #{_forward_impl.1} parent=1 // pred_fallthru
      _
    // Predicated region
    $region34: #{_forward_impl.1} parent=1 // pred_check
      _
    $region35: #{_forward_impl.1} parent=1 // pred_check_branch
      %62 = sbr.rel (0) target = $region37
    $region36: #{_forward_impl.1} parent=1 // pred_region
      %63 = dma.done [#allocation5], 1024
    $region37: #{_forward_impl.1} parent=1 // pred_fallthru
      _
    // Predicated region
    $region38: #{_forward_impl.1} parent=1 // pred_check
      _
    $region39: #{_forward_impl.1} parent=1 // pred_check_branch
      %65 = sbr.rel (0) target = $region41
    $region40: #{_forward_impl.1} parent=1 // pred_region
      %66 = dma.done [#allocation5], 1024
    $region41: #{_forward_impl.1} parent=1 // pred_fallthru
      _
    %v68 = vld [vmem:[%s0] sm:$0xf]
    %v69 = vld [vmem:[%s0 + $0x4] sm:$0xf]
    %v70 = vld [vmem:[#allocation2] sm:$0xf]
    %v71 = vld [vmem:[#allocation2 + $0x4] sm:$0xf]
    %v72 = vld [vmem:[#allocation2 + $0x8] sm:$0xf]
    %v73 = vld [vmem:[#allocation2 + $0xc] sm:$0xf]
    %v74 = vld [vmem:[#allocation2 + $0x10] sm:$0xf]
    %v75 = vld [vmem:[#allocation2 + $0x14] sm:$0xf]
    %v76 = vld [vmem:[#allocation2 + $0x18] sm:$0xf]
    %v77 = vld [vmem:[#allocation2 + $0x1c] sm:$0xf]
    %v78 = vld [vmem:[#allocation2 + $0x20] sm:$0xf]
    %v79 = vld [vmem:[#allocation2 + $0x24] sm:$0xf]
    %v80 = vld [vmem:[#allocation2 + $0x28] sm:$0xf]
    %v81 = vld [vmem:[#allocation2 + $0x2c] sm:$0xf]
    %v82 = vld [vmem:[#allocation2 + $0x30] sm:$0xf]
    %v83 = vld [vmem:[#allocation2 + $0x34] sm:$0xf]
    %v84 = vld [vmem:[#allocation2 + $0x38] sm:$0xf]
    %v85 = vld [vmem:[#allocation2 + $0x3c] sm:$0xf]
    %v86 = vld [vmem:[%s2] sm:$0x1]
    %v88 = vlaneseq
    %v89 = vshrl.u32 %v88, 7
    %v90 = vsub.s32 0, %v89
    %v91 = vrot.slane %v86, %v90
    %v95 = vunpack.c.l.b16 %v68
    %v96 = vunpack.c.l.b16 %v69
    %v97 = vpack.c.b16 %v96, %v95
    %v115 = vunpack.c.l.b16 %v70
    %v116 = vunpack.c.l.b16 %v71
    %v117 = vunpack.c.l.b16 %v72
    %v118 = vunpack.c.l.b16 %v73
    %v119 = vunpack.c.l.b16 %v74
    %v120 = vunpack.c.l.b16 %v75
    %v121 = vunpack.c.l.b16 %v76
    %v122 = vunpack.c.l.b16 %v77
    %v123 = vunpack.c.l.b16 %v78
    %v124 = vunpack.c.l.b16 %v79
    %v125 = vunpack.c.l.b16 %v80
    %v126 = vunpack.c.l.b16 %v81
    %v127 = vunpack.c.l.b16 %v82
    %v128 = vunpack.c.l.b16 %v83
    %v129 = vunpack.c.l.b16 %v84
    %v130 = vunpack.c.l.b16 %v85
    %v131 = vpack.c.b16 %v116, %v115
    %v132 = vpack.c.b16 %v118, %v117
    %v133 = vpack.c.b16 %v120, %v119
    %v134 = vpack.c.b16 %v122, %v121
    %v135 = vpack.c.b16 %v124, %v123
    %v136 = vpack.c.b16 %v126, %v125
    %v137 = vpack.c.b16 %v128, %v127
    %v138 = vpack.c.b16 %v130, %v129
    %147 = vmatprep.subr.bf16.mxu0 0
    %148 = vmatpush1.bf16.msra.mxu0 %v131
    %149 = vmatprep.subr.bf16.mxu0 0
    %150 = vmatpush1.bf16.msra.mxu0 %v132
    %151 = vmatprep.subr.bf16.mxu0 0
    %152 = vmatpush1.bf16.msra.mxu0 %v133
    %153 = vmatprep.subr.bf16.mxu0 0
    %154 = vmatpush1.bf16.msra.mxu0 %v134
    %155 = vmatprep.subr.bf16.mxu0 0
    %156 = vmatpush1.bf16.msra.mxu0 %v135
    %157 = vmatprep.subr.bf16.mxu0 0
    %158 = vmatpush1.bf16.msra.mxu0 %v136
    %159 = vmatprep.subr.bf16.mxu0 0
    %160 = vmatpush1.bf16.msra.mxu0 %v137
    %161 = vmatprep.subr.bf16.mxu0 0
    %162 = vmatpush1.bf16.msra.mxu0 %v138
    %163 = vmatprep.subr.bf16.mxu0 0
    %164 = vmatpush1.bf16.msra.mxu0 0
    %165 = vmatprep.subr.bf16.mxu0 0
    %166 = vmatpush1.bf16.msra.mxu0 0
    %167 = vmatprep.subr.bf16.mxu0 0
    %168 = vmatpush1.bf16.msra.mxu0 0
    %169 = vmatprep.subr.bf16.mxu0 0
    %170 = vmatpush1.bf16.msra.mxu0 0
    %171 = vmatprep.subr.bf16.mxu0 0
    %172 = vmatpush1.bf16.msra.mxu0 0
    %173 = vmatprep.subr.bf16.mxu0 0
    %174 = vmatpush1.bf16.msra.mxu0 0
    %175 = vmatprep.subr.bf16.mxu0 0
    %176 = vmatpush1.bf16.msra.mxu0 0
    %177 = vmatprep.subr.bf16.mxu0 0
    %178 = vmatpush1.bf16.msra.mxu0 0
    %179 = vmatprep.mubr.bf16.mxu0 0
    %180 = vmatmul.mubr.bf16.gmra.mrb[0].mxu0 %v97
    %v181 = vpop.f32.mrb[0].mxu0
    %v182 = vadd.f32 %v91, %v181
    %v183 = vpop.f32.mrb[0].mxu0
    %v184 = vpop.f32.mrb[0].mxu0
    %v185 = vadd.f32 %v91, %v184
    %v186 = vpop.f32.mrb[0].mxu0
    %187 = vdwg.mxu0
    %vm188 = vcmp.ge.f32.partialorder %v182, 0.0
    %vm189 = vcmp.ge.f32.partialorder %v185, 0.0
    %v190 = vmul.f32 %v182, 0.1
    %v191 = vmul.f32 %v185, 0.1
    %v192 = vsel %vm188, %v182, %v190
    %v193 = vsel %vm189, %v185, %v191
    %v194 = vpack.c.bf16 %v193, %v192
    %v195 = vld [vmem:[#allocation4] sm:$0xf]
    %v196 = vld [vmem:[#allocation4 + $0x4] sm:$0xf]
    %v197 = vld [vmem:[#allocation4 + $0x8] sm:$0xf]
    %v198 = vld [vmem:[#allocation4 + $0xc] sm:$0xf]
    %v199 = vld [vmem:[#allocation4 + $0x10] sm:$0xf]
    %v200 = vld [vmem:[#allocation4 + $0x14] sm:$0xf]
    %v201 = vld [vmem:[#allocation4 + $0x18] sm:$0xf]
    %v202 = vld [vmem:[#allocation4 + $0x1c] sm:$0xf]
    %v203 = vld [vmem:[#allocation4 + $0x20] sm:$0xf]
    %v204 = vld [vmem:[#allocation4 + $0x24] sm:$0xf]
    %v205 = vld [vmem:[#allocation4 + $0x28] sm:$0xf]
    %v206 = vld [vmem:[#allocation4 + $0x2c] sm:$0xf]
    %v207 = vld [vmem:[#allocation4 + $0x30] sm:$0xf]
    %v208 = vld [vmem:[#allocation4 + $0x34] sm:$0xf]
    %v209 = vld [vmem:[#allocation4 + $0x38] sm:$0xf]
    %v210 = vld [vmem:[#allocation4 + $0x3c] sm:$0xf]
    %v211 = vld [vmem:[%s4] sm:$0x1]
    %v213 = vlaneseq
    %v214 = vshrl.u32 %v213, 7
    %v215 = vsub.s32 0, %v214
    %v216 = vrot.slane %v211, %v215
    %v234 = vunpack.c.l.b16 %v195
    %v235 = vunpack.c.l.b16 %v196
    %v236 = vunpack.c.l.b16 %v197
    %v237 = vunpack.c.l.b16 %v198
    %v238 = vunpack.c.l.b16 %v199
    %v239 = vunpack.c.l.b16 %v200
    %v240 = vunpack.c.l.b16 %v201
    %v241 = vunpack.c.l.b16 %v202
    %v242 = vunpack.c.l.b16 %v203
    %v243 = vunpack.c.l.b16 %v204
    %v244 = vunpack.c.l.b16 %v205
    %v245 = vunpack.c.l.b16 %v206
    %v246 = vunpack.c.l.b16 %v207
    %v247 = vunpack.c.l.b16 %v208
    %v248 = vunpack.c.l.b16 %v209
    %v249 = vunpack.c.l.b16 %v210
    %v250 = vpack.c.b16 %v235, %v234
    %v251 = vpack.c.b16 %v237, %v236
    %v252 = vpack.c.b16 %v239, %v238
    %v253 = vpack.c.b16 %v241, %v240
    %v254 = vpack.c.b16 %v243, %v242
    %v255 = vpack.c.b16 %v245, %v244
    %v256 = vpack.c.b16 %v247, %v246
    %v257 = vpack.c.b16 %v249, %v248
    %266 = vmatprep.subr.bf16.mxu0 0
    %267 = vmatpush1.bf16.msra.mxu0 %v250
    %268 = vmatprep.subr.bf16.mxu0 0
    %269 = vmatpush1.bf16.msra.mxu0 %v251
    %270 = vmatprep.subr.bf16.mxu0 0
    %271 = vmatpush1.bf16.msra.mxu0 %v252
    %272 = vmatprep.subr.bf16.mxu0 0
    %273 = vmatpush1.bf16.msra.mxu0 %v253
    %274 = vmatprep.subr.bf16.mxu0 0
    %275 = vmatpush1.bf16.msra.mxu0 %v254
    %276 = vmatprep.subr.bf16.mxu0 0
    %277 = vmatpush1.bf16.msra.mxu0 %v255
    %278 = vmatprep.subr.bf16.mxu0 0
    %279 = vmatpush1.bf16.msra.mxu0 %v256
    %280 = vmatprep.subr.bf16.mxu0 0
    %281 = vmatpush1.bf16.msra.mxu0 %v257
    %282 = vmatprep.subr.bf16.mxu0 0
    %283 = vmatpush1.bf16.msra.mxu0 0
    %284 = vmatprep.subr.bf16.mxu0 0
    %285 = vmatpush1.bf16.msra.mxu0 0
    %286 = vmatprep.subr.bf16.mxu0 0
    %287 = vmatpush1.bf16.msra.mxu0 0
    %288 = vmatprep.subr.bf16.mxu0 0
    %289 = vmatpush1.bf16.msra.mxu0 0
    %290 = vmatprep.subr.bf16.mxu0 0
    %291 = vmatpush1.bf16.msra.mxu0 0
    %292 = vmatprep.subr.bf16.mxu0 0
    %293 = vmatpush1.bf16.msra.mxu0 0
    %294 = vmatprep.subr.bf16.mxu0 0
    %295 = vmatpush1.bf16.msra.mxu0 0
    %296 = vmatprep.subr.bf16.mxu0 0
    %297 = vmatpush1.bf16.msra.mxu0 0
    %298 = vmatprep.mubr.bf16.mxu0 0
    %299 = vmatmul.mubr.bf16.gmra.mrb[0].mxu0 %v194
    %v300 = vpop.f32.mrb[0].mxu0
    %v301 = vadd.f32 %v216, %v300
    %v302 = vpop.f32.mrb[0].mxu0
    %v303 = vpop.f32.mrb[0].mxu0
    %v304 = vadd.f32 %v216, %v303
    %v305 = vpop.f32.mrb[0].mxu0
    %306 = vdwg.mxu0
    %vm307 = vcmp.ge.f32.partialorder %v301, 0.0
    %vm308 = vcmp.ge.f32.partialorder %v304, 0.0
    %v309 = vmul.f32 %v301, 0.1
    %v310 = vmul.f32 %v304, 0.1
    %v311 = vsel %vm307, %v301, %v309
    %v312 = vsel %vm308, %v304, %v310
    %v313 = vpack.c.bf16 %v312, %v311
    %v314 = vld [vmem:[#allocation6] sm:$0xf]
    %v315 = vld [vmem:[#allocation6 + $0x4] sm:$0xf]
    %v316 = vld [vmem:[#allocation6 + $0x8] sm:$0xf]
    %v317 = vld [vmem:[#allocation6 + $0xc] sm:$0xf]
    %v318 = vld [vmem:[#allocation6 + $0x10] sm:$0xf]
    %v319 = vld [vmem:[#allocation6 + $0x14] sm:$0xf]
    %v320 = vld [vmem:[#allocation6 + $0x18] sm:$0xf]
    %v321 = vld [vmem:[#allocation6 + $0x1c] sm:$0xf]
    %v322 = vld [vmem:[#allocation6 + $0x20] sm:$0xf]
    %v323 = vld [vmem:[#allocation6 + $0x24] sm:$0xf]
    %v324 = vld [vmem:[#allocation6 + $0x28] sm:$0xf]
    %v325 = vld [vmem:[#allocation6 + $0x2c] sm:$0xf]
    %v326 = vld [vmem:[#allocation6 + $0x30] sm:$0xf]
    %v327 = vld [vmem:[#allocation6 + $0x34] sm:$0xf]
    %v328 = vld [vmem:[#allocation6 + $0x38] sm:$0xf]
    %v329 = vld [vmem:[#allocation6 + $0x3c] sm:$0xf]
    %v330 = vld [vmem:[%s6] sm:$0x1]
    %v332 = vlaneseq
    %v333 = vshrl.u32 %v332, 7
    %v334 = vsub.s32 0, %v333
    %v335 = vrot.slane %v330, %v334
    %v353 = vunpack.c.l.b16 %v314
    %v354 = vunpack.c.l.b16 %v315
    %v355 = vunpack.c.l.b16 %v316
    %v356 = vunpack.c.l.b16 %v317
    %v357 = vunpack.c.l.b16 %v318
    %v358 = vunpack.c.l.b16 %v319
    %v359 = vunpack.c.l.b16 %v320
    %v360 = vunpack.c.l.b16 %v321
    %v361 = vunpack.c.l.b16 %v322
    %v362 = vunpack.c.l.b16 %v323
    %v363 = vunpack.c.l.b16 %v324
    %v364 = vunpack.c.l.b16 %v325
    %v365 = vunpack.c.l.b16 %v326
    %v366 = vunpack.c.l.b16 %v327
    %v367 = vunpack.c.l.b16 %v328
    %v368 = vunpack.c.l.b16 %v329
    %v369 = vpack.c.b16 %v354, %v353
    %v370 = vpack.c.b16 %v356, %v355
    %v371 = vpack.c.b16 %v358, %v357
    %v372 = vpack.c.b16 %v360, %v359
    %v373 = vpack.c.b16 %v362, %v361
    %v374 = vpack.c.b16 %v364, %v363
    %v375 = vpack.c.b16 %v366, %v365
    %v376 = vpack.c.b16 %v368, %v367
    %385 = vmatprep.subr.bf16.mxu0 0
    %386 = vmatpush1.bf16.msra.mxu0 %v369
    %387 = vmatprep.subr.bf16.mxu0 0
    %388 = vmatpush1.bf16.msra.mxu0 %v370
    %389 = vmatprep.subr.bf16.mxu0 0
    %390 = vmatpush1.bf16.msra.mxu0 %v371
    %391 = vmatprep.subr.bf16.mxu0 0
    %392 = vmatpush1.bf16.msra.mxu0 %v372
    %393 = vmatprep.subr.bf16.mxu0 0
    %394 = vmatpush1.bf16.msra.mxu0 %v373
    %395 = vmatprep.subr.bf16.mxu0 0
    %396 = vmatpush1.bf16.msra.mxu0 %v374
    %397 = vmatprep.subr.bf16.mxu0 0
    %398 = vmatpush1.bf16.msra.mxu0 %v375
    %399 = vmatprep.subr.bf16.mxu0 0
    %400 = vmatpush1.bf16.msra.mxu0 %v376
    %401 = vmatprep.subr.bf16.mxu0 0
    %402 = vmatpush1.bf16.msra.mxu0 0
    %403 = vmatprep.subr.bf16.mxu0 0
    %404 = vmatpush1.bf16.msra.mxu0 0
    %405 = vmatprep.subr.bf16.mxu0 0
    %406 = vmatpush1.bf16.msra.mxu0 0
    %407 = vmatprep.subr.bf16.mxu0 0
    %408 = vmatpush1.bf16.msra.mxu0 0
    %409 = vmatprep.subr.bf16.mxu0 0
    %410 = vmatpush1.bf16.msra.mxu0 0
    %411 = vmatprep.subr.bf16.mxu0 0
    %412 = vmatpush1.bf16.msra.mxu0 0
    %413 = vmatprep.subr.bf16.mxu0 0
    %414 = vmatpush1.bf16.msra.mxu0 0
    %415 = vmatprep.subr.bf16.mxu0 0
    %416 = vmatpush1.bf16.msra.mxu0 0
    %417 = vmatprep.mubr.bf16.mxu0 0
    %418 = vmatmul.mubr.bf16.gmra.mrb[0].mxu0 %v313
    %v419 = vpop.f32.mrb[0].mxu0
    %v420 = vadd.f32 %v335, %v419
    %v421 = vpop.f32.mrb[0].mxu0
    %v422 = vpop.f32.mrb[0].mxu0
    %v423 = vadd.f32 %v335, %v422
    %v424 = vpop.f32.mrb[0].mxu0
    %425 = vdwg.mxu0
    %v426 = vpack.c.bf16 %v423, %v420
    %v428 = vunpack.c.l.b16 %v426
    %v429 = vunpack.c.h.b16 %v426
    %v430 = vpack.c.b16 %v428, %v428
    %v431 = vpack.c.b16 %v429, %v429
    %434 = vst [vmem:[%s7] sm:$0xf] %v430
    %435 = vst [vmem:[%s7 + $0x4] sm:$0xf] %v431
    // Predicated region
    $region42: #{_forward_impl.1} parent=1 // pred_check
      _
    $region43: #{_forward_impl.1} parent=1 // pred_check_branch
      %437 = sbr.rel (0) target = $region45
    $region44: #{_forward_impl.1} parent=1 // pred_region
      _
    $region45: #{_forward_impl.1} parent=1 // pred_fallthru
      _
    // Predicated region
    $region46: #{_forward_impl.1} parent=1 // pred_check
      _
    $region47: #{_forward_impl.1} parent=1 // pred_check_branch
      %439 = sbr.rel (0) target = $region49
    $region48: #{_forward_impl.1} parent=1 // pred_region
      _
    $region49: #{_forward_impl.1} parent=1 // pred_fallthru
      _
    %440 = vsyncpa [#allocation3], 1
    %441 = vsyncpa [#allocation5], 1

// kernel: _forward_impl.1
$region0: #{_forward_impl.1}
  #allocation0 [shape = 'u32[]', space=smem, size = 0x4, offset = 0x4, fixed_abs, tag = 'smem constant byte address 0x4 - core index']
  #allocation1 [shape = 'u32[144,128]{1,0:T(1,128)}', space=vmem, size = 0x12000, scoped, tag = 'internal scratch']
  %s0 = inlined_call_operand.vmem [shape: bf16[16,128], index: 0, kind: input, shape index: {}]
  %s1 = inlined_call_operand.hbm [shape: bf16[128,128], index: 1, kind: input, shape index: {}]
  %s2 = inlined_call_operand.vmem [shape: f32[1,128], index: 2, kind: input, shape index: {}]
  %s3 = inlined_call_operand.hbm [shape: bf16[128,128], index: 3, kind: input, shape index: {}]
  %s4 = inlined_call_operand.vmem [shape: f32[1,128], index: 4, kind: input, shape index: {}]
  %s5 = inlined_call_operand.hbm [shape: bf16[128,128], index: 5, kind: input, shape index: {}]
  %s6 = inlined_call_operand.vmem [shape: f32[1,128], index: 6, kind: input, shape index: {}]
  %s7 = inlined_call_operand.vmem [shape: bf16[16,128], index: 7, kind: output, shape index: {}]
  %s8 = sld [smem:[#allocation0]]
  $region50: #{_forward_impl.1} parent=0
    _
  %s10 = ssub.s32 1, %s8
  %s11 = scalar_select 0, %s10, %s8
  $region1: #{_forward_impl.1} parent=0
    #allocation2 [shape = 'u8[32768]{0}', space=vmem, size = 0x8000, scoped, tag = 'input window, operand 1, single buffered']
    #allocation3 [shape = 's32[1]{0}', space=sflag, size = 0x4, scoped, tag = 'scoped memory for _forward_impl.1']
    #allocation4 [shape = 'u8[32768]{0}', space=vmem, size = 0x8000, scoped, tag = 'input window, operand 3, single buffered']
    #allocation5 [shape = 's32[1]{0}', space=sflag, size = 0x4, scoped, tag = 'scoped memory for _forward_impl.1']
    #allocation6 [shape = 'u8[32768]{0}', space=vmem, size = 0x8000, scoped, tag = 'input window, operand 5, single buffered']
    %12 = vsyncpa [#allocation3], 0
    %13 = vsyncpa [#allocation5], 0
    // Predicated region
    $region2: #{_forward_impl.1} parent=1 // pred_check
      _
    $region3: #{_forward_impl.1} parent=1 // pred_check_branch
      %15 = sbr.rel (0) target = $region5
    $region4: #{_forward_impl.1} parent=1 // pred_region
      _
    $region5: #{_forward_impl.1} parent=1 // pred_fallthru
      _
    // Predicated region
    $region6: #{_forward_impl.1} parent=1 // pred_check
      _
    $region7: #{_forward_impl.1} parent=1 // pred_check_branch
      %17 = sbr.rel (0) target = $region9
    $region8: #{_forward_impl.1} parent=1 // pred_region
      %s19 = ssub.s32 1024, 1024
      %20 = vsyncadd [#allocation3], %s19
      %s21 = sshll.u32 [#allocation2], 4
      %s22 = int_to_ptr.vmem [resolvable:$true] %s21
      %27 = dma.hbm_to_vmem [thread:$0]  %s1, 1024, %s22, [#allocation3], 64, 64, 4
    $region9: #{_forward_impl.1} parent=1 // pred_fallthru
      _
    // Predicated region
    $region10: #{_forward_impl.1} parent=1 // pred_check
      _
    $region11: #{_forward_impl.1} parent=1 // pred_check_branch
      %29 = sbr.rel (0) target = $region13
    $region12: #{_forward_impl.1} parent=1 // pred_region
      _
    $region13: #{_forward_impl.1} parent=1 // pred_fallthru
      _
    // Predicated region
    $region14: #{_forward_impl.1} parent=1 // pred_check
      _
    $region15: #{_forward_impl.1} parent=1 // pred_check_branch
      %31 = sbr.rel (0) target = $region17
    $region16: #{_forward_impl.1} parent=1 // pred_region
      %s33 = ssub.s32 1024, 1024
      %34 = vsyncadd [#allocation5], %s33
      %s35 = sshll.u32 [#allocation4], 4
      %s36 = int_to_ptr.vmem [resolvable:$true] %s35
      %41 = dma.hbm_to_vmem [thread:$0]  %s3, 1024, %s36, [#allocation5], 64, 64, 4
    $region17: #{_forward_impl.1} parent=1 // pred_fallthru
      _
    // Predicated region
    $region18: #{_forward_impl.1} parent=1 // pred_check
      _
    $region19: #{_forward_impl.1} parent=1 // pred_check_branch
      %43 = sbr.rel (0) target = $region21
    $region20: #{_forward_impl.1} parent=1 // pred_region
      _
    $region21: #{_forward_impl.1} parent=1 // pred_fallthru
      _
    // Predicated region
    $region22: #{_forward_impl.1} parent=1 // pred_check
      _
    $region23: #{_forward_impl.1} parent=1 // pred_check_branch
      %45 = sbr.rel (0) target = $region25
    $region24: #{_forward_impl.1} parent=1 // pred_region
      %s47 = ssub.s32 1024, 1024
      %48 = vsyncadd [#allocation5], %s47
      %s49 = sshll.u32 [#allocation6], 4
      %s50 = int_to_ptr.vmem [resolvable:$true] %s49
      %55 = dma.hbm_to_vmem [thread:$0]  %s5, 1024, %s50, [#allocation5], 64, 64, 4
    $region25: #{_forward_impl.1} parent=1 // pred_fallthru
      _
    // Predicated region
    $region26: #{_forward_impl.1} parent=1 // pred_check
      _
    $region27: #{_forward_impl.1} parent=1 // pred_check_branch
      %57 = sbr.rel (0) target = $region29
    $region28: #{_forward_impl.1} parent=1 // pred_region
      _
    $region29: #{_forward_impl.1} parent=1 // pred_fallthru
      _
    // Predicated region
    $region30: #{_forward_impl.1} parent=1 // pred_check
      _
    $region31: #{_forward_impl.1} parent=1 // pred_check_branch
      %59 = sbr.rel (0) target = $region33
    $region32: #{_forward_impl.1} parent=1 // pred_region
      %60 = dma.done [#allocation3], 1024
    $region33: #{_forward_impl.1} parent=1 // pred_fallthru
      _
    // Predicated region
    $region34: #{_forward_impl.1} parent=1 // pred_check
      _
    $region35: #{_forward_impl.1} parent=1 // pred_check_branch
      %62 = sbr.rel (0) target = $region37
    $region36: #{_forward_impl.1} parent=1 // pred_region
      %63 = dma.done [#allocation5], 1024
    $region37: #{_forward_impl.1} parent=1 // pred_fallthru
      _
    // Predicated region
    $region38: #{_forward_impl.1} parent=1 // pred_check
      _
    $region39: #{_forward_impl.1} parent=1 // pred_check_branch
      %65 = sbr.rel (0) target = $region41
    $region40: #{_forward_impl.1} parent=1 // pred_region
      %66 = dma.done [#allocation5], 1024
    $region41: #{_forward_impl.1} parent=1 // pred_fallthru
      _
    %v68 = vld [vmem:[%s0] sm:$0xf]
    %v69 = vld [vmem:[%s0 + $0x4] sm:$0xf]
    %v70 = vld [vmem:[#allocation2] sm:$0xf]
    %v71 = vld [vmem:[#allocation2 + $0x4] sm:$0xf]
    %v72 = vld [vmem:[#allocation2 + $0x8] sm:$0xf]
    %v73 = vld [vmem:[#allocation2 + $0xc] sm:$0xf]
    %v74 = vld [vmem:[#allocation2 + $0x10] sm:$0xf]
    %v75 = vld [vmem:[#allocation2 + $0x14] sm:$0xf]
    %v76 = vld [vmem:[#allocation2 + $0x18] sm:$0xf]
    %v77 = vld [vmem:[#allocation2 + $0x1c] sm:$0xf]
    %v78 = vld [vmem:[#allocation2 + $0x20] sm:$0xf]
    %v79 = vld [vmem:[#allocation2 + $0x24] sm:$0xf]
    %v80 = vld [vmem:[#allocation2 + $0x28] sm:$0xf]
    %v81 = vld [vmem:[#allocation2 + $0x2c] sm:$0xf]
    %v82 = vld [vmem:[#allocation2 + $0x30] sm:$0xf]
    %v83 = vld [vmem:[#allocation2 + $0x34] sm:$0xf]
    %v84 = vld [vmem:[#allocation2 + $0x38] sm:$0xf]
    %v85 = vld [vmem:[#allocation2 + $0x3c] sm:$0xf]
    %v86 = vld [vmem:[%s2] sm:$0x1]
    %v88 = vlaneseq
    %v89 = vshrl.u32 %v88, 7
    %v90 = vsub.s32 0, %v89
    %v91 = vrot.slane %v86, %v90
    %v95 = vunpack.c.l.b16 %v68
    %v96 = vunpack.c.l.b16 %v69
    %v97 = vpack.c.b16 %v96, %v95
    %v115 = vunpack.c.l.b16 %v70
    %v116 = vunpack.c.l.b16 %v71
    %v117 = vunpack.c.l.b16 %v72
    %v118 = vunpack.c.l.b16 %v73
    %v119 = vunpack.c.l.b16 %v74
    %v120 = vunpack.c.l.b16 %v75
    %v121 = vunpack.c.l.b16 %v76
    %v122 = vunpack.c.l.b16 %v77
    %v123 = vunpack.c.l.b16 %v78
    %v124 = vunpack.c.l.b16 %v79
    %v125 = vunpack.c.l.b16 %v80
    %v126 = vunpack.c.l.b16 %v81
    %v127 = vunpack.c.l.b16 %v82
    %v128 = vunpack.c.l.b16 %v83
    %v129 = vunpack.c.l.b16 %v84
    %v130 = vunpack.c.l.b16 %v85
    %v131 = vpack.c.b16 %v116, %v115
    %v132 = vpack.c.b16 %v118, %v117
    %v133 = vpack.c.b16 %v120, %v119
    %v134 = vpack.c.b16 %v122, %v121
    %v135 = vpack.c.b16 %v124, %v123
    %v136 = vpack.c.b16 %v126, %v125
    %v137 = vpack.c.b16 %v128, %v127
    %v138 = vpack.c.b16 %v130, %v129
    %147 = vmatprep.subr.bf16.mxu0 0
    %148 = vmatpush1.bf16.msra.mxu0 %v131
    %149 = vmatprep.subr.bf16.mxu0 0
    %150 = vmatpush1.bf16.msra.mxu0 %v132
    %151 = vmatprep.subr.bf16.mxu0 0
    %152 = vmatpush1.bf16.msra.mxu0 %v133
    %153 = vmatprep.subr.bf16.mxu0 0
    %154 = vmatpush1.bf16.msra.mxu0 %v134
    %155 = vmatprep.subr.bf16.mxu0 0
    %156 = vmatpush1.bf16.msra.mxu0 %v135
    %157 = vmatprep.subr.bf16.mxu0 0
    %158 = vmatpush1.bf16.msra.mxu0 %v136
    %159 = vmatprep.subr.bf16.mxu0 0
    %160 = vmatpush1.bf16.msra.mxu0 %v137
    %161 = vmatprep.subr.bf16.mxu0 0
    %162 = vmatpush1.bf16.msra.mxu0 %v138
    %163 = vmatprep.subr.bf16.mxu0 0
    %164 = vmatpush1.bf16.msra.mxu0 0
    %165 = vmatprep.subr.bf16.mxu0 0
    %166 = vmatpush1.bf16.msra.mxu0 0
    %167 = vmatprep.subr.bf16.mxu0 0
    %168 = vmatpush1.bf16.msra.mxu0 0
    %169 = vmatprep.subr.bf16.mxu0 0
    %170 = vmatpush1.bf16.msra.mxu0 0
    %171 = vmatprep.subr.bf16.mxu0 0
    %172 = vmatpush1.bf16.msra.mxu0 0
    %173 = vmatprep.subr.bf16.mxu0 0
    %174 = vmatpush1.bf16.msra.mxu0 0
    %175 = vmatprep.subr.bf16.mxu0 0
    %176 = vmatpush1.bf16.msra.mxu0 0
    %177 = vmatprep.subr.bf16.mxu0 0
    %178 = vmatpush1.bf16.msra.mxu0 0
    %179 = vmatprep.mubr.bf16.mxu0 0
    %180 = vmatmul.mubr.bf16.gmra.mrb[0].mxu0 %v97
    %v181 = vpop.f32.mrb[0].mxu0
    %v182 = vadd.f32 %v91, %v181
    %v183 = vpop.f32.mrb[0].mxu0
    %v184 = vpop.f32.mrb[0].mxu0
    %v185 = vadd.f32 %v91, %v184
    %v186 = vpop.f32.mrb[0].mxu0
    %187 = vdwg.mxu0
    %vm188 = vcmp.ge.f32.partialorder %v182, 0.0
    %vm189 = vcmp.ge.f32.partialorder %v185, 0.0
    %v190 = vmul.f32 %v182, 0.1
    %v191 = vmul.f32 %v185, 0.1
    %v192 = vsel %vm188, %v182, %v190
    %v193 = vsel %vm189, %v185, %v191
    %v194 = vpack.c.bf16 %v193, %v192
    %v195 = vld [vmem:[#allocation4] sm:$0xf]
    %v196 = vld [vmem:[#allocation4 + $0x4] sm:$0xf]
    %v197 = vld [vmem:[#allocation4 + $0x8] sm:$0xf]
    %v198 = vld [vmem:[#allocation4 + $0xc] sm:$0xf]
    %v199 = vld [vmem:[#allocation4 + $0x10] sm:$0xf]
    %v200 = vld [vmem:[#allocation4 + $0x14] sm:$0xf]
    %v201 = vld [vmem:[#allocation4 + $0x18] sm:$0xf]
    %v202 = vld [vmem:[#allocation4 + $0x1c] sm:$0xf]
    %v203 = vld [vmem:[#allocation4 + $0x20] sm:$0xf]
    %v204 = vld [vmem:[#allocation4 + $0x24] sm:$0xf]
    %v205 = vld [vmem:[#allocation4 + $0x28] sm:$0xf]
    %v206 = vld [vmem:[#allocation4 + $0x2c] sm:$0xf]
    %v207 = vld [vmem:[#allocation4 + $0x30] sm:$0xf]
    %v208 = vld [vmem:[#allocation4 + $0x34] sm:$0xf]
    %v209 = vld [vmem:[#allocation4 + $0x38] sm:$0xf]
    %v210 = vld [vmem:[#allocation4 + $0x3c] sm:$0xf]
    %v211 = vld [vmem:[%s4] sm:$0x1]
    %v213 = vlaneseq
    %v214 = vshrl.u32 %v213, 7
    %v215 = vsub.s32 0, %v214
    %v216 = vrot.slane %v211, %v215
    %v234 = vunpack.c.l.b16 %v195
    %v235 = vunpack.c.l.b16 %v196
    %v236 = vunpack.c.l.b16 %v197
    %v237 = vunpack.c.l.b16 %v198
    %v238 = vunpack.c.l.b16 %v199
    %v239 = vunpack.c.l.b16 %v200
    %v240 = vunpack.c.l.b16 %v201
    %v241 = vunpack.c.l.b16 %v202
    %v242 = vunpack.c.l.b16 %v203
    %v243 = vunpack.c.l.b16 %v204
    %v244 = vunpack.c.l.b16 %v205
    %v245 = vunpack.c.l.b16 %v206
    %v246 = vunpack.c.l.b16 %v207
    %v247 = vunpack.c.l.b16 %v208
    %v248 = vunpack.c.l.b16 %v209
    %v249 = vunpack.c.l.b16 %v210
    %v250 = vpack.c.b16 %v235, %v234
    %v251 = vpack.c.b16 %v237, %v236
    %v252 = vpack.c.b16 %v239, %v238
    %v253 = vpack.c.b16 %v241, %v240
    %v254 = vpack.c.b16 %v243, %v242
    %v255 = vpack.c.b16 %v245, %v244
    %v256 = vpack.c.b16 %v247, %v246
    %v257 = vpack.c.b16 %v249, %v248
    %266 = vmatprep.subr.bf16.mxu0 0
    %267 = vmatpush1.bf16.msra.mxu0 %v250
    %268 = vmatprep.subr.bf16.mxu0 0
    %269 = vmatpush1.bf16.msra.mxu0 %v251
    %270 = vmatprep.subr.bf16.mxu0 0
    %271 = vmatpush1.bf16.msra.mxu0 %v252
    %272 = vmatprep.subr.bf16.mxu0 0
    %273 = vmatpush1.bf16.msra.mxu0 %v253
    %274 = vmatprep.subr.bf16.mxu0 0
    %275 = vmatpush1.bf16.msra.mxu0 %v254
    %276 = vmatprep.subr.bf16.mxu0 0
    %277 = vmatpush1.bf16.msra.mxu0 %v255
    %278 = vmatprep.subr.bf16.mxu0 0
    %279 = vmatpush1.bf16.msra.mxu0 %v256
    %280 = vmatprep.subr.bf16.mxu0 0
    %281 = vmatpush1.bf16.msra.mxu0 %v257
    %282 = vmatprep.subr.bf16.mxu0 0
    %283 = vmatpush1.bf16.msra.mxu0 0
    %284 = vmatprep.subr.bf16.mxu0 0
    %285 = vmatpush1.bf16.msra.mxu0 0
    %286 = vmatprep.subr.bf16.mxu0 0
    %287 = vmatpush1.bf16.msra.mxu0 0
    %288 = vmatprep.subr.bf16.mxu0 0
    %289 = vmatpush1.bf16.msra.mxu0 0
    %290 = vmatprep.subr.bf16.mxu0 0
    %291 = vmatpush1.bf16.msra.mxu0 0
    %292 = vmatprep.subr.bf16.mxu0 0
    %293 = vmatpush1.bf16.msra.mxu0 0
    %294 = vmatprep.subr.bf16.mxu0 0
    %295 = vmatpush1.bf16.msra.mxu0 0
    %296 = vmatprep.subr.bf16.mxu0 0
    %297 = vmatpush1.bf16.msra.mxu0 0
    %298 = vmatprep.mubr.bf16.mxu0 0
    %299 = vmatmul.mubr.bf16.gmra.mrb[0].mxu0 %v194
    %v300 = vpop.f32.mrb[0].mxu0
    %v301 = vadd.f32 %v216, %v300
    %v302 = vpop.f32.mrb[0].mxu0
    %v303 = vpop.f32.mrb[0].mxu0
    %v304 = vadd.f32 %v216, %v303
    %v305 = vpop.f32.mrb[0].mxu0
    %306 = vdwg.mxu0
    %vm307 = vcmp.ge.f32.partialorder %v301, 0.0
    %vm308 = vcmp.ge.f32.partialorder %v304, 0.0
    %v309 = vmul.f32 %v301, 0.1
    %v310 = vmul.f32 %v304, 0.1
    %v311 = vsel %vm307, %v301, %v309
    %v312 = vsel %vm308, %v304, %v310
    %v313 = vpack.c.bf16 %v312, %v311
    %v314 = vld [vmem:[#allocation6] sm:$0xf]
    %v315 = vld [vmem:[#allocation6 + $0x4] sm:$0xf]
    %v316 = vld [vmem:[#allocation6 + $0x8] sm:$0xf]
    %v317 = vld [vmem:[#allocation6 + $0xc] sm:$0xf]
    %v318 = vld [vmem:[#allocation6 + $0x10] sm:$0xf]
    %v319 = vld [vmem:[#allocation6 + $0x14] sm:$0xf]
    %v320 = vld [vmem:[#allocation6 + $0x18] sm:$0xf]
    %v321 = vld [vmem:[#allocation6 + $0x1c] sm:$0xf]
    %v322 = vld [vmem:[#allocation6 + $0x20] sm:$0xf]
    %v323 = vld [vmem:[#allocation6 + $0x24] sm:$0xf]
    %v324 = vld [vmem:[#allocation6 + $0x28] sm:$0xf]
    %v325 = vld [vmem:[#allocation6 + $0x2c] sm:$0xf]
    %v326 = vld [vmem:[#allocation6 + $0x30] sm:$0xf]
    %v327 = vld [vmem:[#allocation6 + $0x34] sm:$0xf]
    %v328 = vld [vmem:[#allocation6 + $0x38] sm:$0xf]
    %v329 = vld [vmem:[#allocation6 + $0x3c] sm:$0xf]
    %v330 = vld [vmem:[%s6] sm:$0x1]
    %v332 = vlaneseq
    %v333 = vshrl.u32 %v332, 7
    %v334 = vsub.s32 0, %v333
    %v335 = vrot.slane %v330, %v334
    %v353 = vunpack.c.l.b16 %v314
    %v354 = vunpack.c.l.b16 %v315
    %v355 = vunpack.c.l.b16 %v316
    %v356 = vunpack.c.l.b16 %v317
    %v357 = vunpack.c.l.b16 %v318
    %v358 = vunpack.c.l.b16 %v319
    %v359 = vunpack.c.l.b16 %v320
    %v360 = vunpack.c.l.b16 %v321
    %v361 = vunpack.c.l.b16 %v322
    %v362 = vunpack.c.l.b16 %v323
    %v363 = vunpack.c.l.b16 %v324
    %v364 = vunpack.c.l.b16 %v325
    %v365 = vunpack.c.l.b16 %v326
    %v366 = vunpack.c.l.b16 %v327
    %v367 = vunpack.c.l.b16 %v328
    %v368 = vunpack.c.l.b16 %v329
    %v369 = vpack.c.b16 %v354, %v353
    %v370 = vpack.c.b16 %v356, %v355
    %v371 = vpack.c.b16 %v358, %v357
    %v372 = vpack.c.b16 %v360, %v359
    %v373 = vpack.c.b16 %v362, %v361
    %v374 = vpack.c.b16 %v364, %v363
    %v375 = vpack.c.b16 %v366, %v365
    %v376 = vpack.c.b16 %v368, %v367
    %385 = vmatprep.subr.bf16.mxu0 0
    %386 = vmatpush1.bf16.msra.mxu0 %v369
    %387 = vmatprep.subr.bf16.mxu0 0
    %388 = vmatpush1.bf16.msra.mxu0 %v370
    %389 = vmatprep.subr.bf16.mxu0 0
    %390 = vmatpush1.bf16.msra.mxu0 %v371
    %391 = vmatprep.subr.bf16.mxu0 0
    %392 = vmatpush1.bf16.msra.mxu0 %v372
    %393 = vmatprep.subr.bf16.mxu0 0
    %394 = vmatpush1.bf16.msra.mxu0 %v373
    %395 = vmatprep.subr.bf16.mxu0 0
    %396 = vmatpush1.bf16.msra.mxu0 %v374
    %397 = vmatprep.subr.bf16.mxu0 0
    %398 = vmatpush1.bf16.msra.mxu0 %v375
    %399 = vmatprep.subr.bf16.mxu0 0
    %400 = vmatpush1.bf16.msra.mxu0 %v376
    %401 = vmatprep.subr.bf16.mxu0 0
    %402 = vmatpush1.bf16.msra.mxu0 0
    %403 = vmatprep.subr.bf16.mxu0 0
    %404 = vmatpush1.bf16.msra.mxu0 0
    %405 = vmatprep.subr.bf16.mxu0 0
    %406 = vmatpush1.bf16.msra.mxu0 0
    %407 = vmatprep.subr.bf16.mxu0 0
    %408 = vmatpush1.bf16.msra.mxu0 0
    %409 = vmatprep.subr.bf16.mxu0 0
    %410 = vmatpush1.bf16.msra.mxu0 0
    %411 = vmatprep.subr.bf16.mxu0 0
    %412 = vmatpush1.bf16.msra.mxu0 0
    %413 = vmatprep.subr.bf16.mxu0 0
    %414 = vmatpush1.bf16.msra.mxu0 0
    %415 = vmatprep.subr.bf16.mxu0 0
    %416 = vmatpush1.bf16.msra.mxu0 0
    %417 = vmatprep.mubr.bf16.mxu0 0
    %418 = vmatmul.mubr.bf16.gmra.mrb[0].mxu0 %v313
    %v419 = vpop.f32.mrb[0].mxu0
    %v420 = vadd.f32 %v335, %v419
    %v421 = vpop.f32.mrb[0].mxu0
    %v422 = vpop.f32.mrb[0].mxu0
    %v423 = vadd.f32 %v335, %v422
    %v424 = vpop.f32.mrb[0].mxu0
    %425 = vdwg.mxu0
    %v426 = vpack.c.bf16 %v423, %v420
    %v428 = vunpack.c.l.b16 %v426
    %v429 = vunpack.c.h.b16 %v426
    %v430 = vpack.c.b16 %v428, %v428
    %v431 = vpack.c.b16 %v429, %v429
    %434 = vst [vmem:[%s7] sm:$0xf] %v430
    %435 = vst [vmem:[%s7 + $0x4] sm:$0xf] %v431
    // Predicated region
    $region42: #{_forward_impl.1} parent=1 // pred_check
      _
    $region43: #{_forward_impl.1} parent=1 // pred_check_branch
      %437 = sbr.rel (0) target = $region45
    $region44: #{_forward_impl.1} parent=1 // pred_region
      _
    $region45: #{_forward_impl.1} parent=1 // pred_fallthru
      _
    // Predicated region
    $region46: #{_forward_impl.1} parent=1 // pred_check
      _
    $region47: #{_forward_impl.1} parent=1 // pred_check_branch
      %439 = sbr.rel (0) target = $region49
    $region48: #{_forward_impl.1} parent=1 // pred_region
      _
    $region49: #{_forward_impl.1} parent=1 // pred_fallthru
      _
    %440 = vsyncpa [#allocation3], 1
    %441 = vsyncpa [#allocation5], 1

</llo_original>
